<compile_context>
chip_gen: v7x
topology: tpu7x:2x2x1
jax: 0.10.0
libtpu: 0.0.40
codegen_flags: <defaults>
</compile_context>

<pallas_src>
import jax
import jax.numpy as jnp
from jax.experimental import pallas as pl
from jax.experimental.pallas import tpu as pltpu

_LANE = 128
_PIX_ROW_ALIGN = 32          # uint8 sublane packing -> rows multiple of 32
_MAX_PIX_ROW_TILE = 1024     # 1024 rows * 128 lanes = 128K pixels / grid step
_VERT_ROW_ALIGN = 8          # f32 sublane tiling
_MAX_VERT_ROW_TILE = 512     # 64K vertices / grid step
_VMEM_LIMIT = 32 * 1024 * 1024   # <= 40 MiB: safe on v7x (64 MiB physical VMEM)

_COLOR_LUT = (
    (200.0, 100.0, 0.0),
    (50.0, 200.0, 50.0),
    (50.0, 50.0, 200.0),
    (100.0, 150.0, 50.0),
    (120.0, 5.0, 200.0),
)


# ---------------------------------------------------------------------------
# helpers (glue, plain JAX / Python)
# ---------------------------------------------------------------------------
def _round_up(n, m):
    return ((n + m - 1) // m) * m


def _cdiv(a, b):
    return -(-a // b)


def _choose_row_tile(rows, *, align, max_rows, min_splits):
    """Pick a sublane row tile (multiple of `align`) capped at `max_rows`.

    For large problems the tile is sized so the grid has >= min_splits steps,
    letting dimension_semantics=('parallel',) shard across v7x's 2 TensorCores.
    """
    rows = max(rows, 1)
    target = _round_up(_cdiv(rows, min_splits), align)
    return max(align, min(max_rows, target))


def fov_camera_matrices(R, T, znear, zfar, fov, aspect_ratio=1.0):
    """PyTorch3D FoVPerspectiveCameras matrices in row-vector convention.

    Returns (M_world_to_view, M_world_to_ndc), both (4, 4), for p_h @ M.
    get_ndc_camera_transform() is the identity for FoV (NDC-space) cameras.
    """
    R = R.astype(jnp.float32)
    T = T.astype(jnp.float32)
    m_wv = jnp.zeros((4, 4), jnp.float32)
    m_wv = m_wv.at[:3, :3].set(R)
    m_wv = m_wv.at[3, :3].set(T)
    m_wv = m_wv.at[3, 3].set(1.0)

    tan_half = jnp.tan(jnp.asarray(fov, jnp.float32) / 2.0)
    max_y = tan_half * znear
    max_x = max_y * aspect_ratio
    K = jnp.zeros((4, 4), jnp.float32)
    K = K.at[0, 0].set(znear / max_x)
    K = K.at[1, 1].set(znear / max_y)
    K = K.at[3, 2].set(1.0)
    K = K.at[2, 2].set(zfar / (zfar - znear))
    K = K.at[2, 3].set(-(zfar * znear) / (zfar - znear))

    m_proj = m_wv @ K.T            # row vectors: p_h @ m_wv @ K^T
    return m_wv, m_proj


# ---------------------------------------------------------------------------
# Kernel 1: mesh_transform  (world -> [ndc_x, ndc_y, view_z]), sublane-dense
# ---------------------------------------------------------------------------
def _mesh_transform_kernel(m_ref, pts_ref, out_ref):
    # m_ref  : SMEM (4, 4) f32, columns = [proj_x, proj_y, view_z, proj_w]
    # pts_ref: (3, RT, 128) f32 world-space points (no homogeneous ones row)
    # out_ref: (3, RT, 128) f32 [ndc_x, ndc_y, view_z]
    p0 = pts_ref[0]
    p1 = pts_ref[1]
    p2 = pts_ref[2]
    q = []
    for j in range(4):                       # unrolled VPU mul-adds (no MXU)
        q.append(p0 * m_ref[0, j] + p1 * m_ref[1, j]
                 + p2 * m_ref[2, j] + m_ref[3, j])   # w-row folded as constant
    x_p, y_p, z_view, w_p = q
    inv_w = 1.0 / w_p                        # eps=None in the reference module
    out_ref[0] = x_p * inv_w
    out_ref[1] = y_p * inv_w
    out_ref[2] = z_view


def mesh_transform_pallas(face_vertices, m_wv, m_proj):
    """face_vertices (F, 3, 3) world -> (F, 3, 3) [ndc_x, ndc_y, view_z]."""
    F = face_vertices.shape[0]
    n = F * 3
    pts_t = face_vertices.reshape(-1, 3).astype(jnp.float32).T      # (3, N)

    rows = _cdiv(n, _LANE)
    tile = _choose_row_tile(rows, align=_VERT_ROW_ALIGN,
                            max_rows=_MAX_VERT_ROW_TILE, min_splits=2)
    rows_pad = _round_up(rows, tile)
    n_pad = rows_pad * _LANE
    # edge-pad the lane tail so padded points keep w != 0 (avoids inf churn)
    pts_t = jnp.pad(pts_t, ((0, 0), (0, n_pad - n)), mode="edge")
    pts_3d = pts_t.reshape(3, rows_pad, _LANE)

    # Only column 2 of the view transform is needed -> fold into a single 4x4.
    m_comb = jnp.stack(
        [m_proj[:, 0], m_proj[:, 1], m_wv[:, 2], m_proj[:, 3]], axis=1)

    out = pl.pallas_call(
        _mesh_transform_kernel,
        out_shape=jax.ShapeDtypeStruct((3, rows_pad, _LANE), jnp.float32),
        grid=(rows_pad // tile,),
        in_specs=[
            pl.BlockSpec(memory_space=pltpu.MemorySpace.SMEM),   # 4x4 scalars
            pl.BlockSpec((3, tile, _LANE), lambda i: (0, i, 0)),
        ],
        out_specs=pl.BlockSpec((3, tile, _LANE), lambda i: (0, i, 0)),
        compiler_params=pltpu.CompilerParams(
            dimension_semantics=("parallel",),
            vmem_limit_bytes=_VMEM_LIMIT),
    )(m_comb, pts_3d)
    return out.reshape(3, n_pad)[:, :n].T.reshape(F, 3, 3)


# ---------------------------------------------------------------------------
# Kernel 2 (fused): masked barycentric UVW interpolation + 'Colored UVW' blend
# ---------------------------------------------------------------------------
def _pixel_render_kernel(bary_ref, guvw_ref, idx_ref, uvw_ref, col_ref):
    # bary_ref: (3, RT, 128) f32   per-vertex barycentric planes
    # guvw_ref: (9, RT, 128) bf16  gathered face UVWs, plane = 3*vertex + chan
    # idx_ref : (RT, 128)    i32   bpid % 5 if valid else -1 (mask merged in)
    # uvw_ref : (3, RT, 128) f32
    # col_ref : (3, RT, 128) u8
    b0 = bary_ref[0]
    b1 = bary_ref[1]
    b2 = bary_ref[2]
    idx = idx_ref[...]
    m = (idx >= 0).astype(jnp.float32)        # validity mask recovered in-kernel

    uvw = []
    for c in range(3):
        uc = (b0 * guvw_ref[c].astype(jnp.float32)
              + b1 * guvw_ref[3 + c].astype(jnp.float32)
              + b2 * guvw_ref[6 + c].astype(jnp.float32)) * m
        uvw.append(uc)
        uvw_ref[c] = uc

    # 5-entry LUT as a compare/select chain on full planes; the 4 compares are
    # hoisted out of the channel loop and reused for all 3 channels.
    is0 = idx == 0
    is1 = idx == 1
    is2 = idx == 2
    is3 = idx == 3
    for c in range(3):
        lut_c = jnp.where(is0, _COLOR_LUT[0][c],
                jnp.where(is1, _COLOR_LUT[1][c],
                jnp.where(is2, _COLOR_LUT[2][c],
                jnp.where(is3, _COLOR_LUT[3][c], _COLOR_LUT[4][c]))))
        col_c = (lut_c * uvw[c] + 255.0 * (1.0 - uvw[c])) * m
        # floor -> matches torch .byte() truncation semantics
        col_ref[c] = jnp.floor(jnp.clip(col_c, 0.0, 255.0)).astype(jnp.uint8)


def render_pixels_pallas(bary_flat, guvw_t, idx_or_neg):
    """Fused masked UVW interpolation + 'Colored UVW' LUT blend.

    bary_flat : (P, 3) float    per-pixel barycentric coords
    guvw_t    : (9, P) bfloat16 gathered face UVWs, row = 3*vertex + channel
    idx_or_neg: (P,)   int32    bpid % 5 if the pixel is valid else -1
    Returns (uvw_t, colored_t) as (3, P) float32 and (3, P) uint8.
    """
    P = bary_flat.shape[0]
    rows = _cdiv(P, _LANE)
    tile = _choose_row_tile(rows, align=_PIX_ROW_ALIGN,
                            max_rows=_MAX_PIX_ROW_TILE, min_splits=4)
    rows_pad = _round_up(rows, tile)
    p_pad = rows_pad * _LANE
    pad = p_pad - P

    bary_t = jnp.pad(bary_flat.astype(jnp.float32).T, ((0, 0), (0, pad)))
    bary_t = bary_t.reshape(3, rows_pad, _LANE)
    guvw_p = jnp.pad(guvw_t.astype(jnp.bfloat16), ((0, 0), (0, pad)))
    guvw_p = guvw_p.reshape(9, rows_pad, _LANE)
    idx_p = jnp.pad(idx_or_neg.astype(jnp.int32), (0, pad), constant_values=-1)
    idx_p = idx_p.reshape(rows_pad, _LANE)

    uvw_t, col_t = pl.pallas_call(
        _pixel_render_kernel,
        out_shape=(jax.ShapeDtypeStruct((3, rows_pad, _LANE), jnp.float32),
                   jax.ShapeDtypeStruct((3, rows_pad, _LANE), jnp.uint8)),
        grid=(rows_pad // tile,),
        in_specs=[
            pl.BlockSpec((3, tile, _LANE), lambda i: (0, i, 0)),
            pl.BlockSpec((9, tile, _LANE), lambda i: (0, i, 0)),
            pl.BlockSpec((tile, _LANE), lambda i: (i, 0)),
        ],
        out_specs=(pl.BlockSpec((3, tile, _LANE), lambda i: (0, i, 0)),
                   pl.BlockSpec((3, tile, _LANE), lambda i: (0, i, 0))),
        compiler_params=pltpu.CompilerParams(
            dimension_semantics=("parallel",),
            vmem_limit_bytes=_VMEM_LIMIT),
    )(bary_t, guvw_p, idx_p)
    return (uvw_t.reshape(3, p_pad)[:, :P], col_t.reshape(3, p_pad)[:, :P])


# ---------------------------------------------------------------------------
# BMeshRenderer.forward (JAX orchestration around the Pallas kernels)
# ---------------------------------------------------------------------------
def bmesh_renderer_forward(camera, face_vertices, face_vertices_uvw,
                           raster_out, render_type="Colored UVW"):
    m_wv, m_proj = fov_camera_matrices(
        camera["R"], camera["T"], camera["znear"], camera["zfar"], camera["fov"])

    # mesh_transform: bmesh_proj.face_verts
    face_verts_ndc = mesh_transform_pallas(face_vertices, m_wv, m_proj)

    # --- rasterizer outputs ------------------------------------------------
    # TODO(synk): BMeshRasterizer is an external CUDA extension; its outputs
    # (pix_to_face, zbuf, bary_coords, valid_mask, ...) are taken as inputs.
    pix_to_face = raster_out["pix_to_face"]            # (H, W) int32
    bary_coords = raster_out["bary_coords"]            # (H, W, 3) float32
    valid_mask = raster_out["valid_mask"]              # (H, W) bool
    bprimitive_image = raster_out["bprimitive_image"]  # (H, W) int32
    outline_coords = raster_out["outline_coords"]      # (B, 2) int32 (x, y)

    H, W = valid_mask.shape
    P = H * W
    Fn = face_vertices_uvw.shape[0]

    # Per-pixel gather of the face UVWs straight into the channel-major (9, P)
    # bf16 layout the fused kernel consumes (row = 3*vertex + channel).
    # Invalid pixels (pix_to_face == -1) are clipped to face 0 and zeroed by
    # the in-kernel mask (idx < 0).
    table_t = face_vertices_uvw.astype(jnp.bfloat16).reshape(Fn, 9).T    # (9, F)
    p2f = jnp.clip(pix_to_face.reshape(P), 0, Fn - 1)
    guvw_t = jnp.take(table_t, p2f, axis=1)                              # (9, P) bf16

    # merged mask + color index: idx >= 0 <=> valid pixel
    idx_or_neg = jnp.where(valid_mask.reshape(P),
                           (bprimitive_image.reshape(P) % 5).astype(jnp.int32),
                           jnp.int32(-1))

    uvw_t, colored_t = render_pixels_pallas(
        bary_coords.reshape(P, 3), guvw_t, idx_or_neg)

    # TODO(synk): these CHW->HWC relayouts are only needed because the module
    # API exposes HWC images; a CHW-consuming downstream would avoid them.
    uvw_image = uvw_t.T.reshape(H, W, 3)

    debug_info = dict(raster_out)
    debug_info["uvw_image"] = uvw_image
    debug_info["face_verts_ndc"] = face_verts_ndc
    # TODO(synk): debug_info['valid_bids'] / ['valid_uvws'] are ragged boolean-
    # mask selections (data-dependent shapes); not representable under jit.

    boundary_bp_id = bprimitive_image[outline_coords[:, 1], outline_coords[:, 0]]
    boundary_uvw = uvw_image[outline_coords[:, 1], outline_coords[:, 0]]
    debug_info["boundary_uvw"] = boundary_uvw
    # TODO(synk): boundary_points_3d = bprimitive_object.evaluate(...) — Bezier
    # patch evaluation is not defined in the provided module; not implemented.
    boundary_points_3d = None

    if render_type == "Colored UVW":
        debug_info["Colored UVW"] = colored_t.T.reshape(H, W, 3)   # uint8
    # TODO(synk): 'Depth Map' / 'Segmentation' / 'Surface Normal' / 'Depth
    # Normal' branches rely on gaussian_blur / evaluate_normal / depth_to_normal
    # which are undefined in the provided module.

    colored_boundary = jnp.zeros((H, W, 3), jnp.uint8)
    colored_boundary = colored_boundary.at[
        outline_coords[:, 1], outline_coords[:, 0], :].set(255)
    debug_info["colored_boundary"] = colored_boundary

    return boundary_points_3d, boundary_bp_id, debug_info


# ---------------------------------------------------------------------------
if __name__ == "__main__":
    key = jax.random.PRNGKey(0)
    F = 32          # faces
    H = W = 16      # image size
    NB = 8          # boundary points
    k1, k2, k3, k4, k5, k6, k7 = jax.random.split(key, 7)

    face_vertices = jax.random.uniform(k1, (F, 3, 3), jnp.float32, -0.5, 0.5)
    uvw_raw = jax.random.uniform(k2, (F, 3, 3), jnp.float32, 0.01, 1.0)
    face_vertices_uvw = uvw_raw / uvw_raw.sum(-1, keepdims=True)

    # deterministic synthetic rasterizer outputs
    pix_to_face = jax.random.randint(k3, (H, W), 0, F, jnp.int32)
    b_raw = jax.random.uniform(k4, (H, W, 3), jnp.float32, 1e-3, 1.0)
    bary_coords = b_raw / b_raw.sum(-1, keepdims=True)
    valid_mask = jax.random.uniform(k5, (H, W)) > 0.3
    bprimitive_image = jax.random.randint(k6, (H, W), 0, 7, jnp.int32)
    outline_coords = jax.random.randint(k7, (NB, 2), 0, W, jnp.int32)

    camera = dict(R=jnp.eye(3, dtype=jnp.float32),
                  T=jnp.array([0.0, 0.0, 3.0], jnp.float32),
                  znear=0.1, zfar=10.0, fov=1.0471975511965976)  # 60 deg, radians

    raster_out = dict(pix_to_face=pix_to_face, bary_coords=bary_coords,
                      valid_mask=valid_mask, bprimitive_image=bprimitive_image,
                      outline_coords=outline_coords)

    _, boundary_bp_id, debug = bmesh_renderer_forward(
        camera, face_vertices, face_vertices_uvw, raster_out,
        render_type="Colored UVW")
    jax.block_until_ready(debug["face_verts_ndc"])
    jax.block_until_ready(debug["uvw_image"])
    jax.block_until_ready(debug["Colored UVW"])

    # ---- pure-JAX reference check ----
    m_wv, m_proj = fov_camera_matrices(camera["R"], camera["T"],
                                       camera["znear"], camera["zfar"],
                                       camera["fov"])
    pts = face_vertices.reshape(-1, 3)
    pts_h = jnp.concatenate([pts, jnp.ones((pts.shape[0], 1), jnp.float32)], -1)
    view = pts_h @ m_wv
    proj = pts_h @ m_proj
    ndc = proj[:, :3] / proj[:, 3:4]
    ref_verts = ndc.at[:, 2].set(view[:, 2]).reshape(F, 3, 3)

    P = H * W
    # full-precision (module-faithful) uvw reference; the kernel ships the
    # gathered UVWs in bf16, so allow ~bf16-eps absolute error.
    gathered = face_vertices_uvw[pix_to_face.reshape(P)]                # (P, 3, 3)
    ref_uvw_flat = jnp.einsum("pv,pvc->pc", bary_coords.reshape(P, 3), gathered)
    ref_uvw_flat = jnp.where(valid_mask.reshape(P, 1), ref_uvw_flat, 0.0)
    ref_uvw = ref_uvw_flat.reshape(H, W, 3)

    # colored reference mirrors the kernel's bf16 gather precision so the
    # integer check is tight; torch .byte() truncation is mirrored via floor.
    table_bf = face_vertices_uvw.astype(jnp.bfloat16).astype(jnp.float32)
    gathered_bf = table_bf[pix_to_face.reshape(P)]
    uvw_bf = jnp.einsum("pv,pvc->pc", bary_coords.reshape(P, 3), gathered_bf)
    uvw_bf = jnp.where(valid_mask.reshape(P, 1), uvw_bf, 0.0)
    lut = jnp.array(_COLOR_LUT, jnp.float32)
    idx5 = bprimitive_image.reshape(P) % 5
    ref_col_f = lut[idx5] * uvw_bf + 255.0 * (1.0 - uvw_bf)
    ref_col_f = jnp.where(valid_mask.reshape(P, 1), ref_col_f, 0.0)
    ref_col = jnp.floor(jnp.clip(ref_col_f, 0.0, 255.0)).astype(jnp.uint8)
    ref_col = ref_col.reshape(H, W, 3)

    assert jnp.allclose(ref_verts, debug["face_verts_ndc"], atol=1e-3, rtol=1e-3)
    assert jnp.allclose(ref_uvw, debug["uvw_image"], atol=1e-2, rtol=0.0)
    col_err = jnp.max(jnp.abs(ref_col.astype(jnp.int32) -
                              debug["Colored UVW"].astype(jnp.int32)))
    assert int(col_err) <= 1                     # +-1 at truncation boundaries
    assert debug["Colored UVW"].shape == (H, W, 3)
    assert debug["Colored UVW"].dtype == jnp.uint8
    assert boundary_bp_id.shape == (NB,)

    print("KERNEL_OK")
</pallas_src>

<mosaic_0001>
module attributes {stable_mosaic.version = 11 : i64} {
  func.func @_mesh_transform_kernel(%arg0: i32, %arg1: memref<4x4xf32, #tpu.memory_space<smem>>, %arg2: memref<3x8x128xf32, #tpu.memory_space<vmem>>, %arg3: memref<3x8x128xf32, #tpu.memory_space<vmem>>) attributes {dimension_semantics = [#tpu.dimension_semantics<parallel>], iteration_bounds = array<i64: 1>, scalar_prefetch = 0 : i64, scratch_operands = 0 : i64, tpu.core_type = #tpu.core_type<tc>, window_params = [{transform_indices = @transform_0, window_bounds = array<i64: 4, 4>}, {transform_indices = @transform_1, window_bounds = array<i64: 3, 8, 128>}, {transform_indices = @transform_2, window_bounds = array<i64: 3, 8, 128>}]} {
    %c0 = arith.constant 0 : index
    %c0_0 = arith.constant 0 : index
    %c0_1 = arith.constant 0 : index
    %0 = vector.load %arg2[%c0, %c0_0, %c0_1] : memref<3x8x128xf32, #tpu.memory_space<vmem>>, vector<1x8x128xf32>
    %1 = vector.shape_cast %0 : vector<1x8x128xf32> to vector<8x128xf32>
    %c1 = arith.constant 1 : index
    %c0_2 = arith.constant 0 : index
    %c0_3 = arith.constant 0 : index
    %2 = vector.load %arg2[%c1, %c0_2, %c0_3] : memref<3x8x128xf32, #tpu.memory_space<vmem>>, vector<1x8x128xf32>
    %3 = vector.shape_cast %2 : vector<1x8x128xf32> to vector<8x128xf32>
    %c2 = arith.constant 2 : index
    %c0_4 = arith.constant 0 : index
    %c0_5 = arith.constant 0 : index
    %4 = vector.load %arg2[%c2, %c0_4, %c0_5] : memref<3x8x128xf32, #tpu.memory_space<vmem>>, vector<1x8x128xf32>
    %5 = vector.shape_cast %4 : vector<1x8x128xf32> to vector<8x128xf32>
    %c0_6 = arith.constant 0 : index
    %c0_7 = arith.constant 0 : index
    %6 = memref.load %arg1[%c0_6, %c0_7] : memref<4x4xf32, #tpu.memory_space<smem>>
    %7 = vector.broadcast %6 : f32 to vector<8x128xf32>
    %8 = arith.mulf %1, %7 : vector<8x128xf32>
    %c1_8 = arith.constant 1 : index
    %c0_9 = arith.constant 0 : index
    %9 = memref.load %arg1[%c1_8, %c0_9] : memref<4x4xf32, #tpu.memory_space<smem>>
    %10 = vector.broadcast %9 : f32 to vector<8x128xf32>
    %11 = arith.mulf %3, %10 : vector<8x128xf32>
    %12 = arith.addf %8, %11 : vector<8x128xf32>
    %c2_10 = arith.constant 2 : index
    %c0_11 = arith.constant 0 : index
    %13 = memref.load %arg1[%c2_10, %c0_11] : memref<4x4xf32, #tpu.memory_space<smem>>
    %14 = vector.broadcast %13 : f32 to vector<8x128xf32>
    %15 = arith.mulf %5, %14 : vector<8x128xf32>
    %16 = arith.addf %12, %15 : vector<8x128xf32>
    %c3 = arith.constant 3 : index
    %c0_12 = arith.constant 0 : index
    %17 = memref.load %arg1[%c3, %c0_12] : memref<4x4xf32, #tpu.memory_space<smem>>
    %18 = vector.broadcast %17 : f32 to vector<8x128xf32>
    %19 = arith.addf %16, %18 : vector<8x128xf32>
    %c0_13 = arith.constant 0 : index
    %c1_14 = arith.constant 1 : index
    %20 = memref.load %arg1[%c0_13, %c1_14] : memref<4x4xf32, #tpu.memory_space<smem>>
    %21 = vector.broadcast %20 : f32 to vector<8x128xf32>
    %22 = arith.mulf %1, %21 : vector<8x128xf32>
    %c1_15 = arith.constant 1 : index
    %c1_16 = arith.constant 1 : index
    %23 = memref.load %arg1[%c1_15, %c1_16] : memref<4x4xf32, #tpu.memory_space<smem>>
    %24 = vector.broadcast %23 : f32 to vector<8x128xf32>
    %25 = arith.mulf %3, %24 : vector<8x128xf32>
    %26 = arith.addf %22, %25 : vector<8x128xf32>
    %c2_17 = arith.constant 2 : index
    %c1_18 = arith.constant 1 : index
    %27 = memref.load %arg1[%c2_17, %c1_18] : memref<4x4xf32, #tpu.memory_space<smem>>
    %28 = vector.broadcast %27 : f32 to vector<8x128xf32>
    %29 = arith.mulf %5, %28 : vector<8x128xf32>
    %30 = arith.addf %26, %29 : vector<8x128xf32>
    %c3_19 = arith.constant 3 : index
    %c1_20 = arith.constant 1 : index
    %31 = memref.load %arg1[%c3_19, %c1_20] : memref<4x4xf32, #tpu.memory_space<smem>>
    %32 = vector.broadcast %31 : f32 to vector<8x128xf32>
    %33 = arith.addf %30, %32 : vector<8x128xf32>
    %c0_21 = arith.constant 0 : index
    %c2_22 = arith.constant 2 : index
    %34 = memref.load %arg1[%c0_21, %c2_22] : memref<4x4xf32, #tpu.memory_space<smem>>
    %35 = vector.broadcast %34 : f32 to vector<8x128xf32>
    %36 = arith.mulf %1, %35 : vector<8x128xf32>
    %c1_23 = arith.constant 1 : index
    %c2_24 = arith.constant 2 : index
    %37 = memref.load %arg1[%c1_23, %c2_24] : memref<4x4xf32, #tpu.memory_space<smem>>
    %38 = vector.broadcast %37 : f32 to vector<8x128xf32>
    %39 = arith.mulf %3, %38 : vector<8x128xf32>
    %40 = arith.addf %36, %39 : vector<8x128xf32>
    %c2_25 = arith.constant 2 : index
    %c2_26 = arith.constant 2 : index
    %41 = memref.load %arg1[%c2_25, %c2_26] : memref<4x4xf32, #tpu.memory_space<smem>>
    %42 = vector.broadcast %41 : f32 to vector<8x128xf32>
    %43 = arith.mulf %5, %42 : vector<8x128xf32>
    %44 = arith.addf %40, %43 : vector<8x128xf32>
    %c3_27 = arith.constant 3 : index
    %c2_28 = arith.constant 2 : index
    %45 = memref.load %arg1[%c3_27, %c2_28] : memref<4x4xf32, #tpu.memory_space<smem>>
    %46 = vector.broadcast %45 : f32 to vector<8x128xf32>
    %47 = arith.addf %44, %46 : vector<8x128xf32>
    %c0_29 = arith.constant 0 : index
    %c3_30 = arith.constant 3 : index
    %48 = memref.load %arg1[%c0_29, %c3_30] : memref<4x4xf32, #tpu.memory_space<smem>>
    %49 = vector.broadcast %48 : f32 to vector<8x128xf32>
    %50 = arith.mulf %1, %49 : vector<8x128xf32>
    %c1_31 = arith.constant 1 : index
    %c3_32 = arith.constant 3 : index
    %51 = memref.load %arg1[%c1_31, %c3_32] : memref<4x4xf32, #tpu.memory_space<smem>>
    %52 = vector.broadcast %51 : f32 to vector<8x128xf32>
    %53 = arith.mulf %3, %52 : vector<8x128xf32>
    %54 = arith.addf %50, %53 : vector<8x128xf32>
    %c2_33 = arith.constant 2 : index
    %c3_34 = arith.constant 3 : index
    %55 = memref.load %arg1[%c2_33, %c3_34] : memref<4x4xf32, #tpu.memory_space<smem>>
    %56 = vector.broadcast %55 : f32 to vector<8x128xf32>
    %57 = arith.mulf %5, %56 : vector<8x128xf32>
    %58 = arith.addf %54, %57 : vector<8x128xf32>
    %c3_35 = arith.constant 3 : index
    %c3_36 = arith.constant 3 : index
    %59 = memref.load %arg1[%c3_35, %c3_36] : memref<4x4xf32, #tpu.memory_space<smem>>
    %60 = vector.broadcast %59 : f32 to vector<8x128xf32>
    %61 = arith.addf %58, %60 : vector<8x128xf32>
    %cst = arith.constant 1.000000e+00 : f32
    %62 = vector.broadcast %cst : f32 to vector<8x128xf32>
    %63 = arith.divf %62, %61 : vector<8x128xf32>
    %64 = arith.mulf %19, %63 : vector<8x128xf32>
    %c0_37 = arith.constant 0 : index
    %c0_38 = arith.constant 0 : index
    %c0_39 = arith.constant 0 : index
    %65 = vector.load %arg3[%c0_37, %c0_38, %c0_39] : memref<3x8x128xf32, #tpu.memory_space<vmem>>, vector<1x8x128xf32>
    %66 = vector.shape_cast %65 : vector<1x8x128xf32> to vector<8x128xf32>
    %67 = vector.shape_cast %64 : vector<8x128xf32> to vector<1x8x128xf32>
    tpu.vector_store %arg3[%c0_37, %c0_38, %c0_39], %67 {strides = array<i32>} : memref<3x8x128xf32, #tpu.memory_space<vmem>>, vector<1x8x128xf32>,
    %68 = arith.mulf %33, %63 : vector<8x128xf32>
    %c1_40 = arith.constant 1 : index
    %c0_41 = arith.constant 0 : index
    %c0_42 = arith.constant 0 : index
    %69 = vector.load %arg3[%c1_40, %c0_41, %c0_42] : memref<3x8x128xf32, #tpu.memory_space<vmem>>, vector<1x8x128xf32>
    %70 = vector.shape_cast %69 : vector<1x8x128xf32> to vector<8x128xf32>
    %71 = vector.shape_cast %68 : vector<8x128xf32> to vector<1x8x128xf32>
    tpu.vector_store %arg3[%c1_40, %c0_41, %c0_42], %71 {strides = array<i32>} : memref<3x8x128xf32, #tpu.memory_space<vmem>>, vector<1x8x128xf32>,
    %c2_43 = arith.constant 2 : index
    %c0_44 = arith.constant 0 : index
    %c0_45 = arith.constant 0 : index
    %72 = vector.load %arg3[%c2_43, %c0_44, %c0_45] : memref<3x8x128xf32, #tpu.memory_space<vmem>>, vector<1x8x128xf32>
    %73 = vector.shape_cast %72 : vector<1x8x128xf32> to vector<8x128xf32>
    %74 = vector.shape_cast %47 : vector<8x128xf32> to vector<1x8x128xf32>
    tpu.vector_store %arg3[%c2_43, %c0_44, %c0_45], %74 {strides = array<i32>} : memref<3x8x128xf32, #tpu.memory_space<vmem>>, vector<1x8x128xf32>,
    return
  }
  func.func @transform_0(%arg0: i32) -> (i32, i32) {
    %c0_i32 = arith.constant 0 : i32
    %c0_i32_0 = arith.constant 0 : i32
    %c0_i32_1 = arith.constant 0 : i32
    return %c0_i32, %c0_i32_0 : i32, i32
  }
  func.func @transform_1(%arg0: i32) -> (i32, i32, i32) {
    %c0_i32 = arith.constant 0 : i32
    %c0_i32_0 = arith.constant 0 : i32
    %c0_i32_1 = arith.constant 0 : i32
    return %c0_i32, %arg0, %c0_i32_0 : i32, i32, i32
  }
  func.func @transform_2(%arg0: i32) -> (i32, i32, i32) {
    %c0_i32 = arith.constant 0 : i32
    %c0_i32_0 = arith.constant 0 : i32
    %c0_i32_1 = arith.constant 0 : i32
    return %c0_i32, %arg0, %c0_i32_0 : i32, i32, i32
  }
}

</mosaic_0001>

<llo_original>
// kernel: tpu_custom_call.1
$region0: #{tpu_custom_call.1}
  #allocation0 [shape = 'u32[]', space=smem, size = 0x4, offset = 0x4, fixed_abs, tag = 'smem constant byte address 0x4 - core index']
  #allocation1 [shape = 'u32[144,128]{1,0:T(1,128)}', space=vmem, size = 0x12000, scoped, tag = 'internal scratch']
  %s0 = inlined_call_operand.hbm [shape: f32[4,4], index: 0, kind: input, shape index: {}]
  %s1 = inlined_call_operand.hbm [shape: f32[3,8,128], index: 1, kind: input, shape index: {}]
  %s2 = inlined_call_operand.hbm [shape: f32[3,8,128], index: 2, kind: output, shape index: {}]
  %s3 = sld [smem:[#allocation0]]
  $region26: #{tpu_custom_call.1} parent=0
    _
  %s5 = ssub.s32 1, %s3
  %s6 = scalar_select 0, %s5, %s3
  $region1: #{tpu_custom_call.1} parent=0
    #allocation2 [shape = 'u8[2048]{0}', space=smem, size = 0x800, scoped, tag = 'input window, operand 0, single buffered']
    #allocation3 [shape = 's32[1]{0}', space=sflag, size = 0x4, scoped, tag = 'scoped memory for tpu_custom_call.1']
    #allocation4 [shape = 's32[1]{0}', space=sflag, size = 0x4, scoped, tag = 'scoped memory for tpu_custom_call.1']
    #allocation5 [shape = 's32[1]{0}', space=sflag, size = 0x4, scoped, tag = 'scoped memory for tpu_custom_call.1']
    #allocation6 [shape = 'u8[12288]{0}', space=vmem, size = 0x3000, scoped, tag = 'input window, operand 1, single buffered']
    #allocation7 [shape = 'u8[12288]{0}', space=vmem, size = 0x3000, scoped, tag = 'output window, operand 0, single buffered']
    %7 = vsyncpa [#allocation5], 0
    %8 = vsyncpa [#allocation3], 0
    %9 = vsyncpa [#allocation4], 0
    // Predicated region
    $region2: #{tpu_custom_call.1} parent=1 // pred_check
      _
    $region3: #{tpu_custom_call.1} parent=1 // pred_check_branch
      %11 = sbr.rel (0) target = $region5
    $region4: #{tpu_custom_call.1} parent=1 // pred_region
      %s13 = ssub.s32 64, 64
      %14 = vsyncadd [#allocation5], %s13
      %17 = dma.hbm_to_smem %s0, 64, [#allocation2], [#allocation5]
    $region5: #{tpu_custom_call.1} parent=1 // pred_fallthru
      _
    // Predicated region
    $region6: #{tpu_custom_call.1} parent=1 // pred_check
      _
    $region7: #{tpu_custom_call.1} parent=1 // pred_check_branch
      %19 = sbr.rel (0) target = $region9
    $region8: #{tpu_custom_call.1} parent=1 // pred_region
      %s21 = ssub.s32 384, 384
      %22 = vsyncadd [#allocation3], %s21
      %s23 = sshll.u32 [#allocation6], 4
      %s24 = int_to_ptr.vmem [resolvable:$true] %s23
      %29 = dma.hbm_to_vmem [thread:$0]  %s1, 384, %s24, [#allocation3], 128, 128, 8
    $region9: #{tpu_custom_call.1} parent=1 // pred_fallthru
      _
    // Predicated region
    $region10: #{tpu_custom_call.1} parent=1 // pred_check
      _
    $region11: #{tpu_custom_call.1} parent=1 // pred_check_branch
      %31 = sbr.rel (0) target = $region13
    $region12: #{tpu_custom_call.1} parent=1 // pred_region
      %32 = dma.done [#allocation5], 64
    $region13: #{tpu_custom_call.1} parent=1 // pred_fallthru
      _
    // Predicated region
    $region14: #{tpu_custom_call.1} parent=1 // pred_check
      _
    $region15: #{tpu_custom_call.1} parent=1 // pred_check_branch
      %34 = sbr.rel (0) target = $region17
    $region16: #{tpu_custom_call.1} parent=1 // pred_region
      %35 = dma.done [#allocation3], 384
    $region17: #{tpu_custom_call.1} parent=1 // pred_fallthru
      _
    %36 = sfence
    %v37 = vld [vmem:[#allocation6] sm:$0xff]
    %s38 = scalar_lea.vmem [#allocation6], 8
    %v39 = vld [vmem:[%s38] sm:$0xff]
    %s40 = scalar_lea.vmem [#allocation6], 16
    %v41 = vld [vmem:[%s40] sm:$0xff]
    %s42 = sld [smem:[#allocation2]]
    %v43 = vstv %s42
    %v44 = vmul.f32 %v37, %v43
    %s45 = sld [smem:[#allocation2 + $0x80]]
    %v46 = vstv %s45
    %v47 = vmul.f32 %v39, %v46
    %v48 = vadd.f32 %v44, %v47
    %s49 = sld [smem:[#allocation2 + $0x100]]
    %v50 = vstv %s49
    %v51 = vmul.f32 %v41, %v50
    %v52 = vadd.f32 %v48, %v51
    %s53 = sld [smem:[#allocation2 + $0x180]]
    %v54 = vstv %s53
    %v55 = vadd.f32 %v52, %v54
    %s56 = sld [smem:[#allocation2 + $0x1]]
    %v57 = vstv %s56
    %v58 = vmul.f32 %v37, %v57
    %s59 = sld [smem:[#allocation2 + $0x81]]
    %v60 = vstv %s59
    %v61 = vmul.f32 %v39, %v60
    %v62 = vadd.f32 %v58, %v61
    %s63 = sld [smem:[#allocation2 + $0x101]]
    %v64 = vstv %s63
    %v65 = vmul.f32 %v41, %v64
    %v66 = vadd.f32 %v62, %v65
    %s67 = sld [smem:[#allocation2 + $0x181]]
    %v68 = vstv %s67
    %v69 = vadd.f32 %v66, %v68
    %s70 = sld [smem:[#allocation2 + $0x2]]
    %v71 = vstv %s70
    %v72 = vmul.f32 %v37, %v71
    %s73 = sld [smem:[#allocation2 + $0x82]]
    %v74 = vstv %s73
    %v75 = vmul.f32 %v39, %v74
    %v76 = vadd.f32 %v72, %v75
    %s77 = sld [smem:[#allocation2 + $0x102]]
    %v78 = vstv %s77
    %v79 = vmul.f32 %v41, %v78
    %v80 = vadd.f32 %v76, %v79
    %s81 = sld [smem:[#allocation2 + $0x182]]
    %v82 = vstv %s81
    %v83 = vadd.f32 %v80, %v82
    %s84 = sld [smem:[#allocation2 + $0x3]]
    %v85 = vstv %s84
    %v86 = vmul.f32 %v37, %v85
    %s87 = sld [smem:[#allocation2 + $0x83]]
    %v88 = vstv %s87
    %v89 = vmul.f32 %v39, %v88
    %v90 = vadd.f32 %v86, %v89
    %s91 = sld [smem:[#allocation2 + $0x103]]
    %v92 = vstv %s91
    %v93 = vmul.f32 %v41, %v92
    %v94 = vadd.f32 %v90, %v93
    %s95 = sld [smem:[#allocation2 + $0x183]]
    %v96 = vstv %s95
    %v97 = vadd.f32 %v94, %v96
    %v98 = vrcp.pop %v97
    %v99 = vmul.f32 1.0, %v98
    %v100 = vmul.f32 %v55, %v99
    %101 = vst [vmem:[#allocation7] sm:$0xff] %v100
    %v102 = vmul.f32 %v69, %v99
    %s103 = scalar_lea.vmem [#allocation7], 8
    %104 = vst [vmem:[%s103] sm:$0xff] %v102
    %s105 = scalar_lea.vmem [#allocation7], 16
    %106 = vst [vmem:[%s105] sm:$0xff] %v83
    // Predicated region
    $region18: #{tpu_custom_call.1} parent=1 // pred_check
      _
    $region19: #{tpu_custom_call.1} parent=1 // pred_check_branch
      %108 = sbr.rel (0) target = $region21
    $region20: #{tpu_custom_call.1} parent=1 // pred_region
      %s110 = ssub.s32 384, 384
      %111 = vsyncadd [#allocation4], %s110
      %s112 = sshll.u32 [#allocation7], 4
      %s113 = int_to_ptr.vmem [resolvable:$true] %s112
      %118 = dma.vmem_to_hbm [thread:$0]  %s113, 384, %s2, [#allocation4], 128, 128, 8
    $region21: #{tpu_custom_call.1} parent=1 // pred_fallthru
      _
    // Predicated region
    $region22: #{tpu_custom_call.1} parent=1 // pred_check
      _
    $region23: #{tpu_custom_call.1} parent=1 // pred_check_branch
      %120 = sbr.rel (0) target = $region25
    $region24: #{tpu_custom_call.1} parent=1 // pred_region
      %121 = dma.done [#allocation4], 384
    $region25: #{tpu_custom_call.1} parent=1 // pred_fallthru
      _
    %122 = vsyncpa [#allocation3], 1
    %123 = vsyncpa [#allocation4], 1
    %124 = vsyncpa [#allocation5], 1

</llo_original>
